<compile_context>
chip_gen: v7x
topology: tpu7x:2x2x1
jax: 0.10.0
libtpu: 0.0.40
codegen_flags: <defaults>
</compile_context>

<pallas_src>
import jax
import jax.numpy as jnp
from jax import lax
from jax.experimental import pallas as pl
from jax.experimental.pallas import tpu as pltpu

LAYER_NORM_EPS = 1e-12


def _round_up(x, m):
    return (x + m - 1) // m * m


def extra_encoding_kernel(pos_ids_ref, seg_ids_ref, feat_ref,
                          pos_table_ref, seg_table_ref,
                          gamma_ref, beta_ref, out_ref):
    tm, hdim = feat_ref.shape
    max_pos = pos_table_ref.shape[0]
    num_seg = seg_table_ref.shape[0]

    pos_ids = pos_ids_ref[...]            # (tm, 1) int32
    seg_ids = seg_ids_ref[...]            # (tm, 1) int32

    # --- Position embedding: one-hot x resident table on the (idle) MXU. ---
    pos_onehot = (lax.broadcasted_iota(jnp.int32, (tm, max_pos), 1)
                  == pos_ids).astype(jnp.float32)
    pos_emb = jnp.dot(pos_onehot, pos_table_ref[...].astype(jnp.float32),
                      preferred_element_type=jnp.float32)

    # --- Segment embedding: tiny table -> unrolled VPU select. ---
    seg_emb = jnp.zeros((tm, hdim), jnp.float32)
    for s in range(num_seg):                                 # static unroll
        row = seg_table_ref[s:s + 1, :].astype(jnp.float32)  # (1, hdim)
        seg_emb = jnp.where(seg_ids == s, row, seg_emb)

    # embeddings = feat + segment_emb + position_emb (f32 accumulation)
    x = feat_ref[...].astype(jnp.float32) + seg_emb + pos_emb

    # LayerNorm over the hidden axis (biased variance, like torch.nn.LayerNorm).
    mean = jnp.mean(x, axis=-1, keepdims=True)
    xc = x - mean
    var = jnp.mean(xc * xc, axis=-1, keepdims=True)
    y = xc * lax.rsqrt(var + LAYER_NORM_EPS) * gamma_ref[...] + beta_ref[...]

    # Dropout: eval-mode identity.
    out_ref[...] = y.astype(out_ref.dtype)


def extra_encoding(feat_embs, position_ids, segment_ids,
                   pos_table, seg_table, gamma, beta, *, tm=256):
    B, S, H = feat_embs.shape
    N = B * S

    # Row-tile size: multiple of 8 sublanes, capped at `tm`; pad the tail.
    TM = min(tm, _round_up(N, 8))
    Np = _round_up(N, TM)

    feat2 = feat_embs.reshape(N, H)
    pos2 = position_ids.reshape(N, 1).astype(jnp.int32)
    seg2 = segment_ids.reshape(N, 1).astype(jnp.int32)
    if Np != N:
        pad = Np - N
        feat2 = jnp.pad(feat2, ((0, pad), (0, 0)))
        pos2 = jnp.pad(pos2, ((0, pad), (0, 0)))   # padded ids -> valid row 0
        seg2 = jnp.pad(seg2, ((0, pad), (0, 0)))

    MAX_POS = pos_table.shape[0]
    NUM_SEG = seg_table.shape[0]

    # Hoist the f32 cast / broadcast of gamma & beta out of the kernel body.
    gamma2 = gamma.reshape(1, H).astype(jnp.float32)
    beta2 = beta.reshape(1, H).astype(jnp.float32)

    out = pl.pallas_call(
        extra_encoding_kernel,
        out_shape=jax.ShapeDtypeStruct((Np, H), feat_embs.dtype),
        grid_spec=pltpu.PrefetchScalarGridSpec(
            num_scalar_prefetch=0,
            grid=(Np // TM,),
            in_specs=[
                # per-tile id columns, aligned with the feature tile
                pl.BlockSpec((TM, 1), lambda i: (i, 0)),
                pl.BlockSpec((TM, 1), lambda i: (i, 0)),
                # feature rows for this tile
                pl.BlockSpec((TM, H), lambda i: (i, 0)),
                # embedding tables: resident in VMEM (constant index_map)
                pl.BlockSpec((MAX_POS, H), lambda i: (0, 0)),
                pl.BlockSpec((NUM_SEG, H), lambda i: (0, 0)),
                # LayerNorm gamma / beta (resident)
                pl.BlockSpec((1, H), lambda i: (0, 0)),
                pl.BlockSpec((1, H), lambda i: (0, 0)),
            ],
            out_specs=pl.BlockSpec((TM, H), lambda i: (i, 0)),
        ),
        compiler_params=pltpu.CompilerParams(
            dimension_semantics=("parallel",)),
    )(pos2, seg2, feat2, pos_table, seg_table, gamma2, beta2)

    return out[:N].reshape(B, S, H)


def extra_encoding_reference(feat_embs, position_ids, segment_ids,
                             pos_table, seg_table, gamma, beta):
    """Pure-JAX reference mirroring the PyTorch forward (eval mode)."""
    seg_emb = jnp.take(seg_table, segment_ids, axis=0)
    pos_emb = jnp.take(pos_table, position_ids, axis=0)
    x = feat_embs + seg_emb + pos_emb
    mean = jnp.mean(x, axis=-1, keepdims=True)
    var = jnp.mean((x - mean) ** 2, axis=-1, keepdims=True)
    return (x - mean) * lax.rsqrt(var + LAYER_NORM_EPS) * gamma + beta


if __name__ == "__main__":
    # Small synthetic configuration.
    B, S, H = 2, 8, 128            # batch, seq, hidden
    MAX_POS = 64                   # stands in for max_position_embeddings
    NUM_SEG = 2                    # segment_type_size

    key = jax.random.PRNGKey(0)
    k_feat, k_pos, k_seg, k_g, k_b = jax.random.split(key, 5)

    feat_embs = jax.random.normal(k_feat, (B, S, H), dtype=jnp.float32)
    pos_table = 0.02 * jax.random.normal(k_pos, (MAX_POS, H), dtype=jnp.float32)
    seg_table = 0.02 * jax.random.normal(k_seg, (NUM_SEG, H), dtype=jnp.float32)
    gamma = 1.0 + 0.01 * jax.random.normal(k_g, (H,), dtype=jnp.float32)
    beta = 0.01 * jax.random.normal(k_b, (H,), dtype=jnp.float32)

    position_ids = jnp.broadcast_to(jnp.arange(S, dtype=jnp.int32), (B, S))
    segment_ids = jnp.concatenate(
        [jnp.zeros((B, S // 2), dtype=jnp.int32),
         jnp.ones((B, S - S // 2), dtype=jnp.int32)], axis=1)

    out = extra_encoding(feat_embs, position_ids, segment_ids,
                         pos_table, seg_table, gamma, beta)
    out = jax.block_until_ready(out)

    ref = extra_encoding_reference(feat_embs, position_ids, segment_ids,
                                   pos_table, seg_table, gamma, beta)
    assert out.shape == (B, S, H)
    assert jnp.max(jnp.abs(out - ref)) < 1e-4, "Pallas kernel mismatch vs reference"

    print("KERNEL_OK")
</pallas_src>

<mosaic_0001>
module attributes {stable_mosaic.version = 11 : i64} {
  func.func @extra_encoding_kernel(%arg0: i32, %arg1: memref<16x1xi32, #tpu.memory_space<vmem>>, %arg2: memref<16x1xi32, #tpu.memory_space<vmem>>, %arg3: memref<16x128xf32, #tpu.memory_space<vmem>>, %arg4: memref<64x128xf32, #tpu.memory_space<vmem>>, %arg5: memref<2x128xf32, #tpu.memory_space<vmem>>, %arg6: memref<1x128xf32, #tpu.memory_space<vmem>>, %arg7: memref<1x128xf32, #tpu.memory_space<vmem>>, %arg8: memref<16x128xf32, #tpu.memory_space<vmem>>) attributes {dimension_semantics = [#tpu.dimension_semantics<parallel>], iteration_bounds = array<i64: 1>, scalar_prefetch = 0 : i64, scratch_operands = 0 : i64, tpu.core_type = #tpu.core_type<tc>, window_params = [{transform_indices = @transform_0, window_bounds = array<i64: 16, 1>}, {transform_indices = @transform_1, window_bounds = array<i64: 16, 1>}, {transform_indices = @transform_2, window_bounds = array<i64: 16, 128>}, {pipeline_mode = #tpu.pipeline_mode<synchronous>, transform_indices = @transform_3, window_bounds = array<i64: 64, 128>}, {pipeline_mode = #tpu.pipeline_mode<synchronous>, transform_indices = @transform_4, window_bounds = array<i64: 2, 128>}, {pipeline_mode = #tpu.pipeline_mode<synchronous>, transform_indices = @transform_5, window_bounds = array<i64: 1, 128>}, {pipeline_mode = #tpu.pipeline_mode<synchronous>, transform_indices = @transform_6, window_bounds = array<i64: 1, 128>}, {transform_indices = @transform_7, window_bounds = array<i64: 16, 128>}]} {
    %c0 = arith.constant 0 : index
    %c0_0 = arith.constant 0 : index
    %0 = vector.load %arg1[%c0, %c0_0] : memref<16x1xi32, #tpu.memory_space<vmem>>, vector<16x1xi32>
    %c0_1 = arith.constant 0 : index
    %c0_2 = arith.constant 0 : index
    %1 = vector.load %arg2[%c0_1, %c0_2] : memref<16x1xi32, #tpu.memory_space<vmem>>, vector<16x1xi32>
    %2 = tpu.iota {dimensions = array<i32: 1>} : vector<16x64xi32>
    %3 = vector.broadcast %0 : vector<16x1xi32> to vector<16x64xi32>
    %4 = arith.cmpi eq, %2, %3 : vector<16x64xi32>
    %5 = arith.extui %4 : vector<16x64xi1> to vector<16x64xi32>
    %6 = arith.sitofp %5 : vector<16x64xi32> to vector<16x64xf32>
    %c0_3 = arith.constant 0 : index
    %c0_4 = arith.constant 0 : index
    %7 = vector.load %arg4[%c0_3, %c0_4] : memref<64x128xf32, #tpu.memory_space<vmem>>, vector<64x128xf32>
    %cst = arith.constant dense<0.000000e+00> : vector<16x128xf32>
    %8 = tpu.matmul %6, %7, %cst {dimension_numbers = #tpu.dot_dimension_numbers<[1], [0], [0], [1], [0, 0, 1, 1], [], []>} : vector<16x64xf32>, vector<64x128xf32>, vector<16x128xf32> -> vector<16x128xf32>
    %cst_5 = arith.constant 0.000000e+00 : f32
    %9 = vector.broadcast %cst_5 : f32 to vector<16x128xf32>
    %c0_6 = arith.constant 0 : index
    %c0_7 = arith.constant 0 : index
    %10 = vector.load %arg5[%c0_6, %c0_7] : memref<2x128xf32, #tpu.memory_space<vmem>>, vector<1x128xf32>
    %c0_i32 = arith.constant 0 : i32
    %11 = vector.broadcast %c0_i32 : i32 to vector<16x1xi32>
    %12 = arith.cmpi eq, %1, %11 : vector<16x1xi32>
    %13 = vector.shape_cast %12 : vector<16x1xi1> to vector<16x1xi1>
    %14 = vector.broadcast %13 : vector<16x1xi1> to vector<16x128xi1>
    %15 = vector.shape_cast %10 : vector<1x128xf32> to vector<1x128xf32>
    %16 = vector.broadcast %15 : vector<1x128xf32> to vector<16x128xf32>
    %17 = arith.select %14, %16, %9 : vector<16x128xi1>, vector<16x128xf32>
    %c1 = arith.constant 1 : index
    %c0_8 = arith.constant 0 : index
    %18 = vector.load %arg5[%c1, %c0_8] : memref<2x128xf32, #tpu.memory_space<vmem>>, vector<1x128xf32>
    %c1_i32 = arith.constant 1 : i32
    %19 = vector.broadcast %c1_i32 : i32 to vector<16x1xi32>
    %20 = arith.cmpi eq, %1, %19 : vector<16x1xi32>
    %21 = vector.shape_cast %20 : vector<16x1xi1> to vector<16x1xi1>
    %22 = vector.broadcast %21 : vector<16x1xi1> to vector<16x128xi1>
    %23 = vector.shape_cast %18 : vector<1x128xf32> to vector<1x128xf32>
    %24 = vector.broadcast %23 : vector<1x128xf32> to vector<16x128xf32>
    %25 = arith.select %22, %24, %17 : vector<16x128xi1>, vector<16x128xf32>
    %c0_9 = arith.constant 0 : index
    %c0_10 = arith.constant 0 : index
    %26 = vector.load %arg3[%c0_9, %c0_10] : memref<16x128xf32, #tpu.memory_space<vmem>>, vector<16x128xf32>
    %27 = arith.addf %26, %25 : vector<16x128xf32>
    %28 = arith.addf %27, %8 : vector<16x128xf32>
    %cst_11 = arith.constant dense<0.000000e+00> : vector<16xf32>
    %29 = vector.multi_reduction <add>, %28, %cst_11 [1] : vector<16x128xf32> to vector<16xf32>
    %30 = vector.shape_cast %29 : vector<16xf32> to vector<16x1xf32>
    %cst_12 = arith.constant 1.280000e+02 : f32
    %31 = vector.broadcast %cst_12 : f32 to vector<16x1xf32>
    %32 = arith.divf %30, %31 : vector<16x1xf32>
    %33 = vector.broadcast %32 : vector<16x1xf32> to vector<16x128xf32>
    %34 = arith.subf %28, %33 : vector<16x128xf32>
    %35 = arith.mulf %34, %34 : vector<16x128xf32>
    %cst_13 = arith.constant dense<0.000000e+00> : vector<16xf32>
    %36 = vector.multi_reduction <add>, %35, %cst_13 [1] : vector<16x128xf32> to vector<16xf32>
    %37 = vector.shape_cast %36 : vector<16xf32> to vector<16x1xf32>
    %cst_14 = arith.constant 1.280000e+02 : f32
    %38 = vector.broadcast %cst_14 : f32 to vector<16x1xf32>
    %39 = arith.divf %37, %38 : vector<16x1xf32>
    %cst_15 = arith.constant 9.99999996E-13 : f32
    %40 = vector.broadcast %cst_15 : f32 to vector<16x1xf32>
    %41 = arith.addf %39, %40 : vector<16x1xf32>
    %42 = math.rsqrt %41 : vector<16x1xf32>
    %43 = vector.broadcast %42 : vector<16x1xf32> to vector<16x128xf32>
    %44 = arith.mulf %34, %43 : vector<16x128xf32>
    %c0_16 = arith.constant 0 : index
    %c0_17 = arith.constant 0 : index
    %45 = vector.load %arg6[%c0_16, %c0_17] : memref<1x128xf32, #tpu.memory_space<vmem>>, vector<1x128xf32>
    %46 = vector.broadcast %45 : vector<1x128xf32> to vector<16x128xf32>
    %47 = arith.mulf %44, %46 : vector<16x128xf32>
    %c0_18 = arith.constant 0 : index
    %c0_19 = arith.constant 0 : index
    %48 = vector.load %arg7[%c0_18, %c0_19] : memref<1x128xf32, #tpu.memory_space<vmem>>, vector<1x128xf32>
    %49 = vector.broadcast %48 : vector<1x128xf32> to vector<16x128xf32>
    %50 = arith.addf %47, %49 : vector<16x128xf32>
    %c0_20 = arith.constant 0 : index
    %c0_21 = arith.constant 0 : index
    %51 = vector.load %arg8[%c0_20, %c0_21] : memref<16x128xf32, #tpu.memory_space<vmem>>, vector<16x128xf32>
    tpu.vector_store %arg8[%c0_20, %c0_21], %50 {strides = array<i32>} : memref<16x128xf32, #tpu.memory_space<vmem>>, vector<16x128xf32>,
    return
  }
  func.func @transform_0(%arg0: i32) -> (i32, i32) {
    %c0_i32 = arith.constant 0 : i32
    %c0_i32_0 = arith.constant 0 : i32
    return %arg0, %c0_i32 : i32, i32
  }
  func.func @transform_1(%arg0: i32) -> (i32, i32) {
    %c0_i32 = arith.constant 0 : i32
    %c0_i32_0 = arith.constant 0 : i32
    return %arg0, %c0_i32 : i32, i32
  }
  func.func @transform_2(%arg0: i32) -> (i32, i32) {
    %c0_i32 = arith.constant 0 : i32
    %c0_i32_0 = arith.constant 0 : i32
    return %arg0, %c0_i32 : i32, i32
  }
  func.func @transform_3(%arg0: i32) -> (i32, i32) {
    %c0_i32 = arith.constant 0 : i32
    %c0_i32_0 = arith.constant 0 : i32
    %c0_i32_1 = arith.constant 0 : i32
    return %c0_i32, %c0_i32_0 : i32, i32
  }
  func.func @transform_4(%arg0: i32) -> (i32, i32) {
    %c0_i32 = arith.constant 0 : i32
    %c0_i32_0 = arith.constant 0 : i32
    %c0_i32_1 = arith.constant 0 : i32
    return %c0_i32, %c0_i32_0 : i32, i32
  }
  func.func @transform_5(%arg0: i32) -> (i32, i32) {
    %c0_i32 = arith.constant 0 : i32
    %c0_i32_0 = arith.constant 0 : i32
    %c0_i32_1 = arith.constant 0 : i32
    return %c0_i32, %c0_i32_0 : i32, i32
  }
  func.func @transform_6(%arg0: i32) -> (i32, i32) {
    %c0_i32 = arith.constant 0 : i32
    %c0_i32_0 = arith.constant 0 : i32
    %c0_i32_1 = arith.constant 0 : i32
    return %c0_i32, %c0_i32_0 : i32, i32
  }
  func.func @transform_7(%arg0: i32) -> (i32, i32) {
    %c0_i32 = arith.constant 0 : i32
    %c0_i32_0 = arith.constant 0 : i32
    return %arg0, %c0_i32 : i32, i32
  }
}

</mosaic_0001>

<llo_original>
// kernel: tpu_custom_call.1
$region0: #{tpu_custom_call.1}
  #allocation0 [shape = 'u32[]', space=smem, size = 0x4, offset = 0x4, fixed_abs, tag = 'smem constant byte address 0x4 - core index']
  #allocation1 [shape = 'u32[144,128]{1,0:T(1,128)}', space=vmem, size = 0x12000, scoped, tag = 'internal scratch']
  %s0 = inlined_call_operand.vmem [shape: s32[16,1], index: 0, kind: input, shape index: {}]
  %s1 = inlined_call_operand.vmem [shape: s32[16,1], index: 1, kind: input, shape index: {}]
  %s2 = inlined_call_operand.vmem [shape: f32[16,128], index: 2, kind: input, shape index: {}]
  %s3 = inlined_call_operand.hbm [shape: f32[64,128], index: 3, kind: input, shape index: {}]
  %s4 = inlined_call_operand.vmem [shape: f32[2,128], index: 4, kind: input, shape index: {}]
  %s5 = inlined_call_operand.vmem [shape: f32[1,128], index: 5, kind: input, shape index: {}]
  %s6 = inlined_call_operand.vmem [shape: f32[1,128], index: 6, kind: input, shape index: {}]
  %s7 = inlined_call_operand.hbm [shape: f32[16,128], index: 7, kind: output, shape index: {}]
  %s8 = sld [smem:[#allocation0]]
  $region42: #{tpu_custom_call.1} parent=0
    _
  %s10 = ssub.s32 1, %s8
  %s11 = scalar_select 0, %s10, %s8
  $region1: #{tpu_custom_call.1} parent=0
    #allocation2 [shape = 'u8[32768]{0}', space=vmem, size = 0x8000, scoped, tag = 'input window, operand 3, single buffered']
    #allocation3 [shape = 's32[1]{0}', space=sflag, size = 0x4, scoped, tag = 'scoped memory for tpu_custom_call.1']
    #allocation4 [shape = 's32[1]{0}', space=sflag, size = 0x4, scoped, tag = 'scoped memory for tpu_custom_call.1']
    #allocation5 [shape = 'u8[8192]{0}', space=vmem, size = 0x2000, scoped, tag = 'output window, operand 0, single buffered']
    %12 = vsyncpa [#allocation3], 0
    %13 = vsyncpa [#allocation4], 0
    // Predicated region
    $region2: #{tpu_custom_call.1} parent=1 // pred_check
      _
    $region3: #{tpu_custom_call.1} parent=1 // pred_check_branch
      %15 = sbr.rel (0) target = $region5
    $region4: #{tpu_custom_call.1} parent=1 // pred_region
      _
    $region5: #{tpu_custom_call.1} parent=1 // pred_fallthru
      _
    // Predicated region
    $region6: #{tpu_custom_call.1} parent=1 // pred_check
      _
    $region7: #{tpu_custom_call.1} parent=1 // pred_check_branch
      %17 = sbr.rel (0) target = $region9
    $region8: #{tpu_custom_call.1} parent=1 // pred_region
      _
    $region9: #{tpu_custom_call.1} parent=1 // pred_fallthru
      _
    // Predicated region
    $region10: #{tpu_custom_call.1} parent=1 // pred_check
      _
    $region11: #{tpu_custom_call.1} parent=1 // pred_check_branch
      %19 = sbr.rel (0) target = $region13
    $region12: #{tpu_custom_call.1} parent=1 // pred_region
      _
    $region13: #{tpu_custom_call.1} parent=1 // pred_fallthru
      _
    // Predicated region
    $region14: #{tpu_custom_call.1} parent=1 // pred_check
      _
    $region15: #{tpu_custom_call.1} parent=1 // pred_check_branch
      %21 = sbr.rel (0) target = $region17
    $region16: #{tpu_custom_call.1} parent=1 // pred_region
      %s23 = ssub.s32 1024, 1024
      %24 = vsyncadd [#allocation3], %s23
      %s25 = sshll.u32 [#allocation2], 4
      %s26 = int_to_ptr.vmem [resolvable:$true] %s25
      %31 = dma.hbm_to_vmem [thread:$0]  %s3, 1024, %s26, [#allocation3], 128, 128, 8
    $region17: #{tpu_custom_call.1} parent=1 // pred_fallthru
      _
    // Predicated region
    $region18: #{tpu_custom_call.1} parent=1 // pred_check
      _
    $region19: #{tpu_custom_call.1} parent=1 // pred_check_branch
      %33 = sbr.rel (0) target = $region21
    $region20: #{tpu_custom_call.1} parent=1 // pred_region
      _
    $region21: #{tpu_custom_call.1} parent=1 // pred_fallthru
      _
    // Predicated region
    $region22: #{tpu_custom_call.1} parent=1 // pred_check
      _
    $region23: #{tpu_custom_call.1} parent=1 // pred_check_branch
      %35 = sbr.rel (0) target = $region25
    $region24: #{tpu_custom_call.1} parent=1 // pred_region
      _
    $region25: #{tpu_custom_call.1} parent=1 // pred_fallthru
      _
    // Predicated region
    $region26: #{tpu_custom_call.1} parent=1 // pred_check
      _
    $region27: #{tpu_custom_call.1} parent=1 // pred_check_branch
      %37 = sbr.rel (0) target = $region29
    $region28: #{tpu_custom_call.1} parent=1 // pred_region
      _
    $region29: #{tpu_custom_call.1} parent=1 // pred_fallthru
      _
    // Predicated region
    $region30: #{tpu_custom_call.1} parent=1 // pred_check
      _
    $region31: #{tpu_custom_call.1} parent=1 // pred_check_branch
      %39 = sbr.rel (0) target = $region33
    $region32: #{tpu_custom_call.1} parent=1 // pred_region
      %40 = dma.done [#allocation3], 1024
    $region33: #{tpu_custom_call.1} parent=1 // pred_fallthru
      _
    %v41 = vld [vmem:[%s0] sm:$0xff]
    %v42 = vld [vmem:[%s0 + $0x8] sm:$0xff]
    %v43 = vld [vmem:[%s1] sm:$0xff]
    %v44 = vld [vmem:[%s1 + $0x8] sm:$0xff]
    %v45 = vlaneseq
    %v46 = vand.u32 %v45, 127
    %47 = vset.pattern.permute.xlu0 0
    %48 = vperm.xlu0 %47, %v41
    %v49 = vpop.permute.xlu0 %48
    %50 = vset.pattern.permute.xlu0 0
    %51 = vperm.xlu0 %50, %v42
    %v52 = vpop.permute.xlu0 %51
    %vm53 = vcmp.eq.s32.totalorder %v46, %v49
    %vm54 = vcmp.eq.s32.totalorder %v46, %v52
    %v55 = vsel %vm53, 1, 0
    %v56 = vsel %vm54, 1, 0
    %v57 = vcvt.s32.f32 %v55
    %v58 = vcvt.s32.f32 %v56
    %v59 = vld [vmem:[#allocation2] sm:$0xff]
    %v60 = vld [vmem:[#allocation2 + $0x8] sm:$0xff]
    %v61 = vld [vmem:[#allocation2 + $0x10] sm:$0xff]
    %v62 = vld [vmem:[#allocation2 + $0x18] sm:$0xff]
    %v63 = vld [vmem:[#allocation2 + $0x20] sm:$0xff]
    %v64 = vld [vmem:[#allocation2 + $0x28] sm:$0xff]
    %v65 = vld [vmem:[#allocation2 + $0x30] sm:$0xff]
    %v66 = vld [vmem:[#allocation2 + $0x38] sm:$0xff]
    %vm67 = vcmask 523264
    %v69 = vsel %vm67, %v57, 0
    %v72 = vsel %vm67, %v58, 0
    %74 = vmatprep.subr.mxu0 0.0
    %75 = vmatpush1.msra.mxu0 %v59
    %76 = vmatprep.subr.mxu0 0.0
    %77 = vmatpush1.msra.mxu0 %v60
    %78 = vmatprep.subr.mxu0 0.0
    %79 = vmatpush1.msra.mxu0 %v61
    %80 = vmatprep.subr.mxu0 0.0
    %81 = vmatpush1.msra.mxu0 %v62
    %82 = vmatprep.subr.mxu0 0.0
    %83 = vmatpush1.msra.mxu0 %v63
    %84 = vmatprep.subr.mxu0 0.0
    %85 = vmatpush1.msra.mxu0 %v64
    %86 = vmatprep.subr.mxu0 0.0
    %87 = vmatpush1.msra.mxu0 %v65
    %88 = vmatprep.subr.mxu0 0.0
    %89 = vmatpush1.msra.mxu0 %v66
    %90 = vmatprep.subr.mxu0 0.0
    %91 = vmatpush1.msra.mxu0 0.0
    %92 = vmatprep.subr.mxu0 0.0
    %93 = vmatpush1.msra.mxu0 0.0
    %94 = vmatprep.subr.mxu0 0.0
    %95 = vmatpush1.msra.mxu0 0.0
    %96 = vmatprep.subr.mxu0 0.0
    %97 = vmatpush1.msra.mxu0 0.0
    %98 = vmatprep.subr.mxu0 0.0
    %99 = vmatpush1.msra.mxu0 0.0
    %100 = vmatprep.subr.mxu0 0.0
    %101 = vmatpush1.msra.mxu0 0.0
    %102 = vmatprep.subr.mxu0 0.0
    %103 = vmatpush1.msra.mxu0 0.0
    %104 = vmatprep.subr.mxu0 0.0
    %105 = vmatpush1.msra.mxu0 0.0
    %106 = vmatprep.subr.mxu0 0.0
    %107 = vmatpush1.msra.mxu0 0.0
    %108 = vmatprep.subr.mxu0 0.0
    %109 = vmatpush1.msra.mxu0 0.0
    %110 = vmatprep.subr.mxu0 0.0
    %111 = vmatpush1.msra.mxu0 0.0
    %112 = vmatprep.subr.mxu0 0.0
    %113 = vmatpush1.msra.mxu0 0.0
    %114 = vmatprep.subr.mxu0 0.0
    %115 = vmatpush1.msra.mxu0 0.0
    %116 = vmatprep.subr.mxu0 0.0
    %117 = vmatpush1.msra.mxu0 0.0
    %118 = vmatprep.subr.mxu0 0.0
    %119 = vmatpush1.msra.mxu0 0.0
    %120 = vmatprep.subr.mxu0 0.0
    %121 = vmatpush1.msra.mxu0 0.0
    %122 = vmatprep.subr.mxu0 0.0
    %123 = vmatpush1.msra.mxu0 0.0
    %124 = vmatprep.subr.mxu0 0.0
    %125 = vmatpush1.msra.mxu0 0.0
    %126 = vmatprep.subr.mxu0 0.0
    %127 = vmatpush1.msra.mxu0 0.0
    %128 = vmatprep.subr.mxu0 0.0
    %129 = vmatpush1.msra.mxu0 0.0
    %130 = vmatprep.subr.mxu0 0.0
    %131 = vmatpush1.msra.mxu0 0.0
    %132 = vmatprep.subr.mxu0 0.0
    %133 = vmatpush1.msra.mxu0 0.0
    %134 = vmatprep.subr.mxu0 0.0
    %135 = vmatpush1.msra.mxu0 0.0
    %136 = vmatprep.subr.mxu0 0.0
    %137 = vmatpush1.msra.mxu0 0.0
    %138 = vmatprep.mubr.f32.mxu0 0.0
    %139 = vmatmul.mubr.f32.gmra.mrb[0].mxu0 %v69
    %v140 = vpop.f32.mrb[0].mxu0
    %v141 = vadd.f32 0.0, %v140
    %v142 = vpop.f32.mrb[0].mxu0
    %143 = vmatprep.mubr.f32.mxu0 0.0
    %144 = vmatmul.mubr.f32.gmra.mrb[0].mxu0 %v72
    %v145 = vpop.f32.mrb[0].mxu0
    %v146 = vadd.f32 0.0, %v145
    %v147 = vpop.f32.mrb[0].mxu0
    %148 = vdwg.mxu0
    %v149 = vld [vmem:[%s4] sm:$0x1]
    %vm150 = vcmp.eq.s32.totalorder %v43, 0
    %vm151 = vcmp.eq.s32.totalorder %v44, 0
    %v152 = vsel %vm150, 1, 0
    %v153 = vsel %vm151, 1, 0
    %154 = vset.pattern.permute.xlu0 0
    %155 = vperm.xlu0 %154, %v152
    %v156 = vpop.permute.xlu0 %155
    %157 = vset.pattern.permute.xlu0 0
    %158 = vperm.xlu0 %157, %v153
    %v159 = vpop.permute.xlu0 %158
    %vm160 = vcmp.eq.s32.totalorder %v156, 1
    %vm161 = vcmp.eq.s32.totalorder %v159, 1
    %v162 = vlaneseq
    %v163 = vshrl.u32 %v162, 7
    %v164 = vsub.s32 0, %v163
    %v165 = vrot.slane %v149, %v164
    %v166 = vsel %vm160, %v165, 0.0
    %v167 = vsel %vm161, %v165, 0.0
    %v168 = vld [vmem:[%s4 + $0x1] sm:$0x1]
    %vm169 = vcmp.eq.s32.totalorder %v43, 1
    %vm170 = vcmp.eq.s32.totalorder %v44, 1
    %v171 = vsel %vm169, 1, 0
    %v172 = vsel %vm170, 1, 0
    %173 = vset.pattern.permute.xlu0 0
    %174 = vperm.xlu0 %173, %v171
    %v175 = vpop.permute.xlu0 %174
    %176 = vset.pattern.permute.xlu0 0
    %177 = vperm.xlu0 %176, %v172
    %v178 = vpop.permute.xlu0 %177
    %vm179 = vcmp.eq.s32.totalorder %v175, 1
    %vm180 = vcmp.eq.s32.totalorder %v178, 1
    %v181 = vlaneseq
    %v182 = vshrl.u32 %v181, 7
    %v183 = vsub.s32 0, %v182
    %v184 = vrot.slane %v168, %v183
    %v185 = vsel %vm179, %v184, %v166
    %v186 = vsel %vm180, %v184, %v167
    %v187 = vld [vmem:[%s2] sm:$0xff]
    %v188 = vld [vmem:[%s2 + $0x8] sm:$0xff]
    %v189 = vadd.f32 %v187, %v185
    %v190 = vadd.f32 %v188, %v186
    %v191 = vadd.f32 %v189, %v141
    %v192 = vadd.f32 %v190, %v146
    %193 = vadd.xlane.f32.xlu0 %v191
    %v194 = vpop.xlane.xlu0 %193
    %195 = vadd.xlane.f32.xlu0 %v192
    %v196 = vpop.xlane.xlu0 %195
    %v197 = vrcp.pop 128.0
    %v198 = vmul.f32 %v194, %v197
    %v199 = vmul.f32 %v196, %v197
    %v200 = vsub.f32 %v191, %v198
    %v201 = vsub.f32 %v192, %v199
    %v202 = vmul.f32 %v200, %v200
    %v203 = vmul.f32 %v201, %v201
    %204 = vadd.xlane.f32.xlu0 %v202
    %v205 = vpop.xlane.xlu0 %204
    %206 = vadd.xlane.f32.xlu0 %v203
    %v207 = vpop.xlane.xlu0 %206
    %v208 = vmul.f32 %v205, %v197
    %v209 = vmul.f32 %v207, %v197
    %v210 = vadd.f32 %v208, 1e-12
    %v211 = vadd.f32 %v209, 1e-12
    %v212 = vrsqrt.pop %v210
    %v213 = vrsqrt.pop %v211
    %v214 = vmul.f32 %v200, %v212
    %v215 = vmul.f32 %v201, %v213
    %v216 = vld [vmem:[%s5] sm:$0x1]
    %v218 = vlaneseq
    %v219 = vshrl.u32 %v218, 7
    %v220 = vsub.s32 0, %v219
    %v221 = vrot.slane %v216, %v220
    %v223 = vmul.f32 %v214, %v221
    %v224 = vmul.f32 %v215, %v221
    %v225 = vld [vmem:[%s6] sm:$0x1]
    %v227 = vlaneseq
    %v228 = vshrl.u32 %v227, 7
    %v229 = vsub.s32 0, %v228
    %v230 = vrot.slane %v225, %v229
    %v232 = vadd.f32 %v223, %v230
    %v233 = vadd.f32 %v224, %v230
    %234 = vst [vmem:[#allocation5] sm:$0xff] %v232
    %235 = vst [vmem:[#allocation5 + $0x8] sm:$0xff] %v233
    // Predicated region
    $region34: #{tpu_custom_call.1} parent=1 // pred_check
      _
    $region35: #{tpu_custom_call.1} parent=1 // pred_check_branch
      %237 = sbr.rel (0) target = $region37
    $region36: #{tpu_custom_call.1} parent=1 // pred_region
      %s239 = ssub.s32 256, 256
      %240 = vsyncadd [#allocation4], %s239
      %s241 = sshll.u32 [#allocation5], 4
      %s242 = int_to_ptr.vmem [resolvable:$true] %s241
      %247 = dma.vmem_to_hbm [thread:$0]  %s242, 256, %s7, [#allocation4], 128, 128, 8
    $region37: #{tpu_custom_call.1} parent=1 // pred_fallthru
      _
    // Predicated region
    $region38: #{tpu_custom_call.1} parent=1 // pred_check
      _
    $region39: #{tpu_custom_call.1} parent=1 // pred_check_branch
      %249 = sbr.rel (0) target = $region41
    $region40: #{tpu_custom_call.1} parent=1 // pred_region
      %250 = dma.done [#allocation4], 256
    $region41: #{tpu_custom_call.1} parent=1 // pred_fallthru
      _
    %251 = vsyncpa [#allocation3], 1
    %252 = vsyncpa [#allocation4], 1

</llo_original>
